<compile_context>
chip_gen: v5e
topology: v5e:2x2
jax: 0.10.0
libtpu: 0.0.40
codegen_flags: <defaults>
</compile_context>

<pallas_src>
import jax
import jax.numpy as jnp
from jax.experimental import pallas as pl
from jax.experimental.pallas import tpu as pltpu


def _conv1x1_relu(x, w, b):
    """x: (Cin, L), w: (Cout, Cin), b: (Cout, 1)  ->  relu(w @ x + b), f32 (Cout, L)."""
    cout, cin = w.shape
    L = x.shape[-1]
    if cin <= 8:
        # Tiny contraction: VPU broadcast-FMA (an (8,4)x(4,L) matmul would waste the MXU;
        # the kernel is HBM-bound anyway).  Static unroll over Cin.
        acc = jnp.zeros((cout, L), jnp.float32) + b
        for c in range(cin):
            acc = acc + w[:, c:c + 1] * x[c:c + 1, :]
    else:
        acc = jnp.dot(w.astype(jnp.float32), x.astype(jnp.float32),
                      preferred_element_type=jnp.float32) + b
    return jnp.maximum(acc, 0.0)


def conv_relu_stats_kernel(x_ref, w_ref, b_ref, stats_ref):
    """Per (batch, spatial-tile): emit per-tile sum and centered sum-of-squares."""
    z = _conv1x1_relu(x_ref[0], w_ref[...], b_ref[...])          # (Cout, L)
    L = z.shape[-1]
    s = jnp.sum(z, axis=-1, keepdims=True)                       # (Cout, 1)
    mean_t = s * (1.0 / L)
    m2 = jnp.sum((z - mean_t) ** 2, axis=-1, keepdims=True)      # (Cout, 1)
    stats_ref[0, 0] = jnp.concatenate([s, m2], axis=-1)          # (Cout, 2)


def conv_relu_bn_kernel(x_ref, w_ref, b_ref, scale_ref, shift_ref, o_ref):
    """Per (batch, spatial-tile): recompute conv+ReLU and apply per-channel affine."""
    z = _conv1x1_relu(x_ref[0], w_ref[...], b_ref[...])          # (Cout, L)
    o_ref[0] = (z * scale_ref[...] + shift_ref[...]).astype(o_ref.dtype)


def _pick_tile(hw, max_lanes=2048):
    """Largest lane tile: full spatial row if it fits, else the biggest
    multiple-of-128 divisor of hw that is <= max_lanes (fallback: full row)."""
    if hw <= max_lanes:
        return hw
    for t in range(max_lanes - max_lanes % 128, 0, -128):
        if hw % t == 0:
            return t
    return hw


def skip_conv_forward(x_nchw, w, b, gamma, beta, eps=1e-5, max_lanes=2048):
    """x_nchw: (N,Cin,H,W); w: (Cout,Cin) [PyTorch conv weight squeezed]; b/gamma/beta: (Cout,)."""
    N, Cin, H, W = x_nchw.shape
    Cout = w.shape[0]
    HW = H * W
    M = N * HW

    tile = _pick_tile(HW, max_lanes)
    T = HW // tile
    grid = (N, T)

    x3 = x_nchw.reshape(N, Cin, HW).astype(jnp.float32)       # free reshape, no transpose
    w32 = w.reshape(Cout, Cin).astype(jnp.float32)
    b32 = b.reshape(Cout, 1).astype(jnp.float32)

    cparams = pltpu.CompilerParams(
        dimension_semantics=("parallel", "parallel"),
        vmem_limit_bytes=32 * 1024 * 1024,   # >= scoped defaults on v5e(16MiB)/v6e/v7x(32MiB)
    )

    x_spec = pl.BlockSpec((1, Cin, tile), lambda n, t: (n, 0, t))
    w_spec = pl.BlockSpec((Cout, Cin), lambda n, t: (0, 0))
    vec_spec = pl.BlockSpec((Cout, 1), lambda n, t: (0, 0))

    # ---- Pass 1: per-tile partial BN statistics (x read once, no y written) ----
    stats = pl.pallas_call(
        conv_relu_stats_kernel,
        out_shape=jax.ShapeDtypeStruct((N, T, Cout, 2), jnp.float32),
        grid_spec=pltpu.PrefetchScalarGridSpec(
            num_scalar_prefetch=0,
            grid=grid,
            in_specs=[x_spec, w_spec, vec_spec],
            out_specs=pl.BlockSpec((1, 1, Cout, 2), lambda n, t: (n, t, 0, 0)),
        ),
        compiler_params=cparams,
    )(x3, w32, b32)

    # Tiny per-channel glue: stable parallel-variance merge (Chan et al.),
    # avoiding the cancellation-prone E[z^2] - E[z]^2 form.
    stats = stats.reshape(N * T, Cout, 2)
    s_t = stats[:, :, 0]                                      # (NT, Cout) per-tile sums
    m2_t = stats[:, :, 1]                                     # (NT, Cout) per-tile centered SS
    cnt = jnp.float32(tile)
    mean = jnp.sum(s_t, axis=0) / M                           # (Cout,)
    mean_t = s_t / cnt
    m2 = jnp.sum(m2_t, axis=0) + cnt * jnp.sum((mean_t - mean[None, :]) ** 2, axis=0)
    var = m2 / M                                              # biased variance (training-mode BN)
    inv = jax.lax.rsqrt(var + eps)
    scale_v = gamma.astype(jnp.float32) * inv                 # (Cout,)
    shift_v = beta.astype(jnp.float32) - mean * scale_v
    scale = scale_v.reshape(Cout, 1)
    shift = shift_v.reshape(Cout, 1)

    # ---- Pass 2: recompute conv+ReLU and apply affine; lane-dense NCHW output ----
    out3 = pl.pallas_call(
        conv_relu_bn_kernel,
        out_shape=jax.ShapeDtypeStruct((N, Cout, HW), jnp.float32),
        grid_spec=pltpu.PrefetchScalarGridSpec(
            num_scalar_prefetch=0,
            grid=grid,
            in_specs=[x_spec, w_spec, vec_spec, vec_spec, vec_spec],
            out_specs=pl.BlockSpec((1, Cout, tile), lambda n, t: (n, 0, t)),
        ),
        compiler_params=cparams,
    )(x3, w32, b32, scale, shift)

    return out3.reshape(N, Cout, H, W)


def skip_conv_reference(x_nchw, w, b, gamma, beta, eps=1e-5):
    """Pure-JAX reference with identical semantics (NCHW throughout)."""
    Cout = w.shape[0]
    z = jnp.einsum("oc,nchw->nohw", w, x_nchw) + b.reshape(1, Cout, 1, 1)
    z = jnp.maximum(z, 0.0)
    mean = jnp.mean(z, axis=(0, 2, 3), keepdims=True)
    var = jnp.mean((z - mean) ** 2, axis=(0, 2, 3), keepdims=True)
    return ((z - mean) * jax.lax.rsqrt(var + eps) * gamma.reshape(1, Cout, 1, 1)
            + beta.reshape(1, Cout, 1, 1))


if __name__ == "__main__":
    # Small shapes consistent with the module: N=2, in_channels=4, H=W=16, filter_size=8.
    N, Cin, H, W = 2, 4, 16, 16
    Cout = 8

    key = jax.random.PRNGKey(0)
    kx, kw, kb = jax.random.split(key, 3)

    x = jax.random.normal(kx, (N, Cin, H, W), dtype=jnp.float32)

    # Conv2d 1x1 parameters: weight (Cout, Cin) [squeezed (Cout,Cin,1,1)], bias (Cout,).
    fan_in = Cin
    bound = 1.0 / jnp.sqrt(fan_in)
    w_conv = jax.random.uniform(kw, (Cout, Cin), jnp.float32, -bound, bound)
    b_conv = jax.random.uniform(kb, (Cout,), jnp.float32, -bound, bound)

    # BatchNorm2d defaults: weight (gamma) = 1, bias (beta) = 0.
    gamma = jnp.ones((Cout,), jnp.float32)
    beta = jnp.zeros((Cout,), jnp.float32)

    out = skip_conv_forward(x, w_conv, b_conv, gamma, beta)
    out = jax.block_until_ready(out)

    ref = skip_conv_reference(x, w_conv, b_conv, gamma, beta)
    assert out.shape == (N, Cout, H, W)
    assert jnp.allclose(out, ref, atol=1e-4, rtol=1e-4), "mismatch vs reference"

    print("KERNEL_OK")
</pallas_src>

<mosaic_0001>
module attributes {stable_mosaic.version = 11 : i64} {
  func.func @conv_relu_stats_kernel(%arg0: i32, %arg1: i32, %arg2: memref<1x4x256xf32, #tpu.memory_space<vmem>>, %arg3: memref<8x4xf32, #tpu.memory_space<vmem>>, %arg4: memref<8x1xf32, #tpu.memory_space<vmem>>, %arg5: memref<1x1x8x2xf32, #tpu.memory_space<vmem>>) attributes {dimension_semantics = [#tpu.dimension_semantics<parallel>, #tpu.dimension_semantics<parallel>], iteration_bounds = array<i64: 2, 1>, scalar_prefetch = 0 : i64, scratch_operands = 0 : i64, tpu.core_type = #tpu.core_type<tc>, window_params = [{transform_indices = @transform_0, window_bounds = array<i64: 1, 4, 256>}, {pipeline_mode = #tpu.pipeline_mode<synchronous>, transform_indices = @transform_1, window_bounds = array<i64: 8, 4>}, {pipeline_mode = #tpu.pipeline_mode<synchronous>, transform_indices = @transform_2, window_bounds = array<i64: 8, 1>}, {transform_indices = @transform_3, window_bounds = array<i64: 1, 1, 8, 2>}]} {
    %c0 = arith.constant 0 : index
    %c0_0 = arith.constant 0 : index
    %c0_1 = arith.constant 0 : index
    %0 = vector.load %arg2[%c0, %c0_0, %c0_1] : memref<1x4x256xf32, #tpu.memory_space<vmem>>, vector<1x4x256xf32>
    %1 = vector.shape_cast %0 : vector<1x4x256xf32> to vector<4x256xf32>
    %c0_2 = arith.constant 0 : index
    %c0_3 = arith.constant 0 : index
    %2 = vector.load %arg3[%c0_2, %c0_3] : memref<8x4xf32, #tpu.memory_space<vmem>>, vector<8x4xf32>
    %c0_4 = arith.constant 0 : index
    %c0_5 = arith.constant 0 : index
    %3 = vector.load %arg4[%c0_4, %c0_5] : memref<8x1xf32, #tpu.memory_space<vmem>>, vector<8x1xf32>
    %cst = arith.constant 0.000000e+00 : f32
    %4 = vector.broadcast %cst : f32 to vector<8x256xf32>
    %5 = vector.broadcast %3 : vector<8x1xf32> to vector<8x256xf32>
    %6 = arith.addf %4, %5 : vector<8x256xf32>
    %7 = vector.extract_strided_slice %2 {offsets = [0, 0], sizes = [8, 1], strides = [1, 1]} : vector<8x4xf32> to vector<8x1xf32>
    %8 = vector.extract_strided_slice %1 {offsets = [0, 0], sizes = [1, 256], strides = [1, 1]} : vector<4x256xf32> to vector<1x256xf32>
    %9 = vector.broadcast %7 : vector<8x1xf32> to vector<8x256xf32>
    %10 = vector.broadcast %8 : vector<1x256xf32> to vector<8x256xf32>
    %11 = arith.mulf %9, %10 : vector<8x256xf32>
    %12 = arith.addf %6, %11 : vector<8x256xf32>
    %13 = vector.extract_strided_slice %2 {offsets = [0, 1], sizes = [8, 1], strides = [1, 1]} : vector<8x4xf32> to vector<8x1xf32>
    %14 = vector.extract_strided_slice %1 {offsets = [1, 0], sizes = [1, 256], strides = [1, 1]} : vector<4x256xf32> to vector<1x256xf32>
    %15 = vector.broadcast %13 : vector<8x1xf32> to vector<8x256xf32>
    %16 = vector.broadcast %14 : vector<1x256xf32> to vector<8x256xf32>
    %17 = arith.mulf %15, %16 : vector<8x256xf32>
    %18 = arith.addf %12, %17 : vector<8x256xf32>
    %19 = vector.extract_strided_slice %2 {offsets = [0, 2], sizes = [8, 1], strides = [1, 1]} : vector<8x4xf32> to vector<8x1xf32>
    %20 = vector.extract_strided_slice %1 {offsets = [2, 0], sizes = [1, 256], strides = [1, 1]} : vector<4x256xf32> to vector<1x256xf32>
    %21 = vector.broadcast %19 : vector<8x1xf32> to vector<8x256xf32>
    %22 = vector.broadcast %20 : vector<1x256xf32> to vector<8x256xf32>
    %23 = arith.mulf %21, %22 : vector<8x256xf32>
    %24 = arith.addf %18, %23 : vector<8x256xf32>
    %25 = vector.extract_strided_slice %2 {offsets = [0, 3], sizes = [8, 1], strides = [1, 1]} : vector<8x4xf32> to vector<8x1xf32>
    %26 = vector.extract_strided_slice %1 {offsets = [3, 0], sizes = [1, 256], strides = [1, 1]} : vector<4x256xf32> to vector<1x256xf32>
    %27 = vector.broadcast %25 : vector<8x1xf32> to vector<8x256xf32>
    %28 = vector.broadcast %26 : vector<1x256xf32> to vector<8x256xf32>
    %29 = arith.mulf %27, %28 : vector<8x256xf32>
    %30 = arith.addf %24, %29 : vector<8x256xf32>
    %cst_6 = arith.constant 0.000000e+00 : f32
    %31 = vector.broadcast %cst_6 : f32 to vector<8x256xf32>
    %32 = arith.maximumf %30, %31 : vector<8x256xf32>
    %cst_7 = arith.constant dense<0.000000e+00> : vector<8xf32>
    %33 = vector.multi_reduction <add>, %32, %cst_7 [1] : vector<8x256xf32> to vector<8xf32>
    %34 = vector.shape_cast %33 : vector<8xf32> to vector<8x1xf32>
    %cst_8 = arith.constant 3.906250e-03 : f32
    %35 = vector.broadcast %cst_8 : f32 to vector<8x1xf32>
    %36 = arith.mulf %34, %35 : vector<8x1xf32>
    %37 = vector.broadcast %36 : vector<8x1xf32> to vector<8x256xf32>
    %38 = arith.subf %32, %37 : vector<8x256xf32>
    %39 = arith.mulf %38, %38 : vector<8x256xf32>
    %cst_9 = arith.constant dense<0.000000e+00> : vector<8xf32>
    %40 = vector.multi_reduction <add>, %39, %cst_9 [1] : vector<8x256xf32> to vector<8xf32>
    %41 = vector.shape_cast %40 : vector<8xf32> to vector<8x1xf32>
    %42 = tpu.concatenate %34, %41 in 1 : vector<8x1xf32>, vector<8x1xf32> -> vector<8x2xf32>
    %c0_10 = arith.constant 0 : index
    %c0_11 = arith.constant 0 : index
    %c0_12 = arith.constant 0 : index
    %c0_13 = arith.constant 0 : index
    %43 = vector.load %arg5[%c0_10, %c0_11, %c0_12, %c0_13] : memref<1x1x8x2xf32, #tpu.memory_space<vmem>>, vector<1x1x8x2xf32>
    %44 = vector.shape_cast %43 : vector<1x1x8x2xf32> to vector<8x2xf32>
    %45 = vector.shape_cast %42 : vector<8x2xf32> to vector<1x1x8x2xf32>
    tpu.vector_store %arg5[%c0_10, %c0_11, %c0_12, %c0_13], %45 {strides = array<i32>} : memref<1x1x8x2xf32, #tpu.memory_space<vmem>>, vector<1x1x8x2xf32>,
    return
  }
  func.func @transform_0(%arg0: i32, %arg1: i32) -> (i32, i32, i32) {
    %c0_i32 = arith.constant 0 : i32
    %c0_i32_0 = arith.constant 0 : i32
    return %arg0, %c0_i32, %arg1 : i32, i32, i32
  }
  func.func @transform_1(%arg0: i32, %arg1: i32) -> (i32, i32) {
    %c0_i32 = arith.constant 0 : i32
    %c0_i32_0 = arith.constant 0 : i32
    %c0_i32_1 = arith.constant 0 : i32
    return %c0_i32, %c0_i32_0 : i32, i32
  }
  func.func @transform_2(%arg0: i32, %arg1: i32) -> (i32, i32) {
    %c0_i32 = arith.constant 0 : i32
    %c0_i32_0 = arith.constant 0 : i32
    %c0_i32_1 = arith.constant 0 : i32
    return %c0_i32, %c0_i32_0 : i32, i32
  }
  func.func @transform_3(%arg0: i32, %arg1: i32) -> (i32, i32, i32, i32) {
    %c0_i32 = arith.constant 0 : i32
    %c0_i32_0 = arith.constant 0 : i32
    %c0_i32_1 = arith.constant 0 : i32
    return %arg0, %arg1, %c0_i32, %c0_i32_0 : i32, i32, i32, i32
  }
}

</mosaic_0001>

<llo_original>
// kernel: tpu_custom_call.1
$region0: #{tpu_custom_call.1}
  #allocation0 [shape = 'u32[]', space=smem, size = 0x4, offset = 0x4, fixed_abs, tag = 'smem constant byte address 0x4 - core index']
  #allocation1 [shape = 'u32[72,128]{1,0:T(1,128)}', space=vmem, size = 0x9000, scoped, tag = 'internal scratch']
  %s0 = inlined_call_operand.vmem [shape: f32[2,4,256], index: 0, kind: input, shape index: {}]
  %s1 = inlined_call_operand.vmem [shape: f32[8,4], index: 1, kind: input, shape index: {}]
  %s2 = inlined_call_operand.vmem [shape: f32[8,1], index: 2, kind: input, shape index: {}]
  %s3 = inlined_call_operand.vmem [shape: f32[2,1,8,2], index: 3, kind: output, shape index: {}]
  %s4 = sld [smem:[#allocation0]]
  $region45: #{tpu_custom_call.1} parent=0
    _
  %s6 = ssub.s32 1, %s4
  %s7 = scalar_select 0, %s6, %s4
  loop: start=0, step=1, limit=4
  $region2: #{tpu_custom_call.1} parent=0 // loop_pre_header
    _
  $region3: #{tpu_custom_call.1} parent=0 // loop_header
    %s9 = sphi 0, %s13
    %p10 = scmp.ge.s32.totalorder %s9, 4
    %s16 = sphi 0, %s28
    %s17 = sphi 0, %s24
    %s18 = sphi 0, %s16
    %s19 = sphi 0, %s17
    %s20 = sphi 0, %s18
    %s21 = sphi 0, %s19
    %s33 = sphi 0, %s35
    %s36 = sphi 0, %s33
    %s37 = sphi 0, %s36
    %s53 = sphi 0, %s37
    %s57 = sphi 0, %s57
    %s59 = sphi 0, %s57
    %s60 = sphi 0, %s59
    %s74 = sphi 0, %s60
    %s78 = sphi 0, %s78
    %s80 = sphi 0, %s78
    %s81 = sphi 0, %s80
    %s95 = sphi 0, %s81
    %s103 = sphi 0, %s105
    %s106 = sphi 0, %s103
    %s107 = sphi 0, %s106
    %s123 = sphi 0, %s107
  $region4: #{tpu_custom_call.1} parent=0 // loop_header_branch
    %12 = sbr.rel (%p10) target = $region8
  $region5: #{tpu_custom_call.1} parent=0 // loop_body
    %s14 = ssub.s32 %s9, 1
    %s15 = ssub.s32 %s9, 2
    %s22 = sadd.s32 1, %s17
    %p23 = scmp.ge.s32.totalorder %s22, 1
    %s24 = scalar_select %p23, 0, %s22
    %s25 = sadd.s32 1, %s16
    %s26 = scalar_select %p23, %s25, %s16
    %p27 = scmp.ge.s32.totalorder %s26, 2
    %s28 = scalar_select %p27, 0, %s26
    %s29 = ssub.s32 %s16, %s28
    %s30 = ssub.s32 %s17, %s24
    %s31 = sor.u32 %s29, %s30
    %p32 = scmp.eq.s32.totalorder %s31, 0
    %s34 = sadd.s32 %s33, 1
    %s35 = scalar_select %p32, %s33, %s34
    %p38 = pneg %p32
    %p39 = scmp.eq.s32.totalorder %s9, 1
    %p40 = por %p38, %p39
    %p41 = scmp.ne.s32.totalorder %s33, %s36
    %p42 = scmp.eq.s32.totalorder %s9, 0
    %p43 = por %p41, %p42
    %p44 = scmp.ne.s32.totalorder %s33, %s36
    %p45 = scmp.eq.s32.totalorder %s14, 1
    %p46 = por %p44, %p45
    %p47 = scmp.ne.s32.totalorder %s36, %s37
    %p48 = scmp.eq.s32.totalorder %s14, 0
    %p49 = por %p47, %p48
    %p50 = scmp.ne.s32.totalorder %s36, %s37
    %p51 = scmp.eq.s32.totalorder %s15, 1
    %p52 = por %p50, %p51
    %p54 = scmp.ne.s32.totalorder %s37, %s53
    %p55 = scmp.eq.s32.totalorder %s15, 0
    %p56 = por %p54, %p55
    %s58 = sadd.s32 %s57, 1
    %p61 = scmp.eq.s32.totalorder %s9, 1
    %p62 = scmp.ne.s32.totalorder %s57, %s59
    %p63 = scmp.eq.s32.totalorder %s9, 0
    %p64 = por %p62, %p63
    %p65 = scmp.ne.s32.totalorder %s57, %s59
    %p66 = scmp.eq.s32.totalorder %s14, 1
    %p67 = por %p65, %p66
    %p68 = scmp.ne.s32.totalorder %s59, %s60
    %p69 = scmp.eq.s32.totalorder %s14, 0
    %p70 = por %p68, %p69
    %p71 = scmp.ne.s32.totalorder %s59, %s60
    %p72 = scmp.eq.s32.totalorder %s15, 1
    %p73 = por %p71, %p72
    %p75 = scmp.ne.s32.totalorder %s60, %s74
    %p76 = scmp.eq.s32.totalorder %s15, 0
    %p77 = por %p75, %p76
    %s79 = sadd.s32 %s78, 1
    %p82 = scmp.eq.s32.totalorder %s9, 1
    %p83 = scmp.ne.s32.totalorder %s78, %s80
    %p84 = scmp.eq.s32.totalorder %s9, 0
    %p85 = por %p83, %p84
    %p86 = scmp.ne.s32.totalorder %s78, %s80
    %p87 = scmp.eq.s32.totalorder %s14, 1
    %p88 = por %p86, %p87
    %p89 = scmp.ne.s32.totalorder %s80, %s81
    %p90 = scmp.eq.s32.totalorder %s14, 0
    %p91 = por %p89, %p90
    %p92 = scmp.ne.s32.totalorder %s80, %s81
    %p93 = scmp.eq.s32.totalorder %s15, 1
    %p94 = por %p92, %p93
    %p96 = scmp.ne.s32.totalorder %s81, %s95
    %p97 = scmp.eq.s32.totalorder %s15, 0
    %p98 = por %p96, %p97
    %s99 = ssub.s32 %s16, %s28
    %s100 = ssub.s32 %s17, %s24
    %s101 = sor.u32 %s99, %s100
    %p102 = scmp.eq.s32.totalorder %s101, 0
    %s104 = sadd.s32 %s103, 1
    %s105 = scalar_select %p102, %s103, %s104
    %p108 = pneg %p102
    %p109 = scmp.eq.s32.totalorder %s9, 1
    %p110 = por %p108, %p109
    %p111 = scmp.ne.s32.totalorder %s103, %s106
    %p112 = scmp.eq.s32.totalorder %s9, 0
    %p113 = por %p111, %p112
    %p114 = scmp.ne.s32.totalorder %s103, %s106
    %p115 = scmp.eq.s32.totalorder %s14, 1
    %p116 = por %p114, %p115
    %p117 = scmp.ne.s32.totalorder %s106, %s107
    %p118 = scmp.eq.s32.totalorder %s14, 0
    %p119 = por %p117, %p118
    %p120 = scmp.ne.s32.totalorder %s106, %s107
    %p121 = scmp.eq.s32.totalorder %s15, 1
    %p122 = por %p120, %p121
    %p124 = scmp.ne.s32.totalorder %s107, %s123
    %p125 = scmp.eq.s32.totalorder %s15, 0
    %p126 = por %p124, %p125
    %p127 = scmp.le.s32.totalorder 1, %s9
    %p128 = scmp.lt.s32.totalorder %s9, 3
    %p129 = pnand %p127, %p128
    %p130 = pneg %p129
    // Predicated region
    $region9: #{tpu_custom_call.1} parent=5 // pred_check
      _
    $region10: #{tpu_custom_call.1} parent=5 // pred_check_branch
      %132 = sbr.rel (%p129) target = $region12
    $region11: #{tpu_custom_call.1} parent=5 // pred_region
      %s133 = ssub.s32 %s9, 1
      // Predicated region
      $region13: #{tpu_custom_call.1} parent=11 // pred_check
        %p134 = pneg %p70
      $region14: #{tpu_custom_call.1} parent=11 // pred_check_branch
        %136 = sbr.rel (%p134) target = $region16
      $region15: #{tpu_custom_call.1} parent=11 // pred_region
        _
      $region16: #{tpu_custom_call.1} parent=11 // pred_fallthru
        _
      // Predicated region
      $region17: #{tpu_custom_call.1} parent=11 // pred_check
        %p137 = pneg %p91
      $region18: #{tpu_custom_call.1} parent=11 // pred_check_branch
        %139 = sbr.rel (%p137) target = $region20
      $region19: #{tpu_custom_call.1} parent=11 // pred_region
        _
      $region20: #{tpu_custom_call.1} parent=11 // pred_fallthru
        _
    $region12: #{tpu_custom_call.1} parent=5 // pred_fallthru
      _
    %p140 = scmp.lt.s32.totalorder %s9, 2
    // Predicated region
    $region21: #{tpu_custom_call.1} parent=5 // pred_check
      %p141 = pneg %p140
    $region22: #{tpu_custom_call.1} parent=5 // pred_check_branch
      %143 = sbr.rel (%p141) target = $region24
    $region23: #{tpu_custom_call.1} parent=5 // pred_region
      // Predicated region
      $region25: #{tpu_custom_call.1} parent=23 // pred_check
        %p144 = pneg %p43
      $region26: #{tpu_custom_call.1} parent=23 // pred_check_branch
        %146 = sbr.rel (%p144) target = $region28
      $region27: #{tpu_custom_call.1} parent=23 // pred_region
        %s147 = smul.u32 2, %s17
        %p148 = scmp.lt.s32.totalorder %s16, 1
        %s149 = scalar_select %p148, %s16, 1
        %p150 = scmp.lt.s32.totalorder %s147, 1
        %s151 = scalar_select %p150, %s147, 1
        %s152 = smul.addr %s149, 2
        %s153 = sadd.s32 %s151, %s152
        %s154 = smul.addr %s153, 4
        %s155 = scalar_lea.vmem %s0, %s154
        %s156 = smul.u32 2, %s17
      $region28: #{tpu_custom_call.1} parent=23 // pred_fallthru
        _
    $region24: #{tpu_custom_call.1} parent=5 // pred_fallthru
      _
    %p157 = scmp.le.s32.totalorder 1, %s9
    %p158 = scmp.lt.s32.totalorder %s9, 3
    %p159 = pnand %p157, %p158
    %p160 = pneg %p159
    // Predicated region
    $region29: #{tpu_custom_call.1} parent=5 // pred_check
      _
    $region30: #{tpu_custom_call.1} parent=5 // pred_check_branch
      %162 = sbr.rel (%p159) target = $region32
    $region31: #{tpu_custom_call.1} parent=5 // pred_region
      %s163 = ssub.s32 %s9, 1
      %s164 = smul.u32 2, %s19
      %p165 = scmp.lt.s32.totalorder %s18, 1
      %s166 = scalar_select %p165, %s18, 1
      %p167 = scmp.lt.s32.totalorder %s164, 1
      %s168 = scalar_select %p167, %s164, 1
      %s169 = smul.addr %s166, 2
      %s170 = sadd.s32 %s168, %s169
      %s171 = smul.addr %s170, 4
      %s172 = scalar_lea.vmem %s0, %s171
      %p173 = pneg %p49
      %p174 = pneg %p46
      %p175 = pneg %p70
      %p176 = pneg %p67
      %p177 = pneg %p91
      %p178 = pneg %p88
      %p179 = pneg %p119
      %p180 = pneg %p116
      %p181 = scmp.lt.s32.totalorder %s18, 1
      %s182 = scalar_select %p181, %s18, 1
      %p183 = scmp.lt.s32.totalorder %s19, 0
      %s184 = scalar_select %p183, %s19, 0
      %s185 = sadd.s32 %s184, %s182
      %s186 = smul.addr %s185, 8
      %s187 = scalar_lea.vmem %s3, %s186
      %s188 = smul.u32 2, %s19
      %p189 = scmp.lt.s32.totalorder %s18, 1
      %s190 = scalar_select %p189, %s18, 1
      %p191 = scmp.lt.s32.totalorder %s188, 1
      %s192 = scalar_select %p191, %s188, 1
      %s193 = smul.addr %s190, 2
      %s194 = sadd.s32 %s192, %s193
      %s195 = smul.addr %s194, 4
      %s196 = scalar_lea.vmem %s0, %s195
      %s197 = smul.u32 2, %s19
      %p198 = scmp.lt.s32.totalorder %s18, 1
      %s199 = scalar_select %p198, %s18, 1
      %p200 = scmp.lt.s32.totalorder %s19, 0
      %s201 = scalar_select %p200, %s19, 0
      %s202 = sadd.s32 %s201, %s199
      %s203 = smul.addr %s202, 8
      %s204 = scalar_lea.vmem %s3, %s203
      %v205 = vld [vmem:[%s196] sm:$0xff]
      %v206 = vld [vmem:[%s1] sm:$0xff]
      %v207 = vld [vmem:[%s2] sm:$0xff]
      %209 = vset.pattern.permute.xlu0 0
      %210 = vperm.xlu0 %209, %v207
      %v211 = vpop.permute.xlu0 %210
      %v213 = vadd.f32 %v211, 0.0
      %215 = vset.pattern.permute.xlu0 0
      %216 = vperm.xlu0 %215, %v206
      %v217 = vpop.permute.xlu0 %216
      %v220 = vperm.slane %v205, 0
      %v221 = vperm.slane %v205, 4
      %v224 = vperm.slane %v220, 0
      %v225 = vperm.slane %v221, 0
      %v226 = vmul.f32 %v217, %v224
      %v227 = vmul.f32 %v217, %v225
      %v228 = vadd.f32 %v213, %v226
      %v229 = vadd.f32 %v213, %v227
      %230 = vset.pattern.permute.xlu0 1
      %231 = vperm.xlu0 %230, %v206
      %v232 = vpop.permute.xlu0 %231
      %v234 = vperm.slane %v205, 1
      %v235 = vperm.slane %v205, 5
      %v238 = vperm.slane %v234, 1
      %v239 = vperm.slane %v235, 1
      %v240 = vmul.f32 %v232, %v238
      %v241 = vmul.f32 %v232, %v239
      %v242 = vadd.f32 %v228, %v240
      %v243 = vadd.f32 %v229, %v241
      %244 = vset.pattern.permute.xlu0 2
      %245 = vperm.xlu0 %244, %v206
      %v246 = vpop.permute.xlu0 %245
      %v248 = vperm.slane %v205, 2
      %v249 = vperm.slane %v205, 6
      %v252 = vperm.slane %v248, 2
      %v253 = vperm.slane %v249, 2
      %v254 = vmul.f32 %v246, %v252
      %v255 = vmul.f32 %v246, %v253
      %v256 = vadd.f32 %v242, %v254
      %v257 = vadd.f32 %v243, %v255
      %258 = vset.pattern.permute.xlu0 3
      %259 = vperm.xlu0 %258, %v206
      %v260 = vpop.permute.xlu0 %259
      %v262 = vperm.slane %v205, 3
      %v263 = vperm.slane %v205, 7
      %v266 = vperm.slane %v262, 3
      %v267 = vperm.slane %v263, 3
      %v268 = vmul.f32 %v260, %v266
      %v269 = vmul.f32 %v260, %v267
      %v270 = vadd.f32 %v256, %v268
      %v271 = vadd.f32 %v257, %v269
      %v272 = vmax.f32 %v270, 0.0
      %v273 = vmax.f32 %v271, 0.0
      %v274 = vadd.f32 %v272, %v273
      %275 = vadd.xlane.f32.xlu0 %v274
      %v276 = vpop.xlane.xlu0 %275
      %v277 = vmul.f32 %v276, 0.00390625
      %v278 = vsub.f32 %v272, %v277
      %v279 = vsub.f32 %v273, %v277
      %v280 = vmul.f32 %v278, %v278
      %v281 = vmul.f32 %v279, %v279
      %v282 = vadd.f32 %v280, %v281
      %283 = vadd.xlane.f32.xlu0 %v282
      %v284 = vpop.xlane.xlu0 %283
      %vm285 = vcmask 7168
      %v286 = vsel %vm285, %v276, %v284
      %vm287 = vcmask 15360
      %288 = vst.msk [vmem:[%s204] sm:$0xff] %vm287, %v286
      %p289 = scmp.lt.s32.totalorder %s18, 1
      %s290 = scalar_select %p289, %s18, 1
      %p291 = scmp.lt.s32.totalorder %s19, 0
      %s292 = scalar_select %p291, %s19, 0
      %s293 = sadd.s32 %s292, %s290
      %s294 = smul.addr %s293, 8
      %s295 = scalar_lea.vmem %s3, %s294
      // Predicated region
      $region33: #{tpu_custom_call.1} parent=31 // pred_check
        %p296 = pneg %p116
      $region34: #{tpu_custom_call.1} parent=31 // pred_check_branch
        %298 = sbr.rel (%p296) target = $region36
      $region35: #{tpu_custom_call.1} parent=31 // pred_region
        _
      $region36: #{tpu_custom_call.1} parent=31 // pred_fallthru
        _
    $region32: #{tpu_custom_call.1} parent=5 // pred_fallthru
      _
    %p299 = scmp.le.s32.totalorder 2, %s9
    // Predicated region
    $region37: #{tpu_custom_call.1} parent=5 // pred_check
      %p300 = pneg %p299
    $region38: #{tpu_custom_call.1} parent=5 // pred_check_branch
      %302 = sbr.rel (%p300) target = $region40
    $region39: #{tpu_custom_call.1} parent=5 // pred_region
      %s303 = ssub.s32 %s9, 2
      // Predicated region
      $region41: #{tpu_custom_call.1} parent=39 // pred_check
        %p304 = pneg %p122
      $region42: #{tpu_custom_call.1} parent=39 // pred_check_branch
        %306 = sbr.rel (%p304) target = $region44
      $region43: #{tpu_custom_call.1} parent=39 // pred_region
        %p307 = scmp.lt.s32.totalorder %s20, 1
        %s308 = scalar_select %p307, %s20, 1
        %p309 = scmp.lt.s32.totalorder %s21, 0
        %s310 = scalar_select %p309, %s21, 0
        %s311 = sadd.s32 %s310, %s308
        %s312 = smul.addr %s311, 8
        %s313 = scalar_lea.vmem %s3, %s312
      $region44: #{tpu_custom_call.1} parent=39 // pred_fallthru
        _
    $region40: #{tpu_custom_call.1} parent=5 // pred_fallthru
      _
  $region6: #{tpu_custom_call.1} parent=0 // loop_footer
    %s13 = sadd.s32 1, %s9
  $region7: #{tpu_custom_call.1} parent=0 // loop_footer_branch
    %8 = sbr.rel target = $region3
  $region8: #{tpu_custom_call.1} parent=0 // loop_exit
    _

</llo_original>
